<compile_context>
chip_gen: v5e
topology: v5e:2x2
jax: 0.10.0
libtpu: 0.0.40
codegen_flags: <defaults>
</compile_context>

<pallas_src>
import functools

import jax
import jax.numpy as jnp
from jax import lax
from jax.experimental import pallas as pl
from jax.experimental.pallas import tpu as pltpu

# ----------------------------- "config" ------------------------------------
N_FEATURES_CFG = 9           # config.n_features
USE_COUNT_RENDERER = False   # config.use_count_renderer
NF = N_FEATURES_CFG - (1 - int(USE_COUNT_RENDERER))   # self.n_features == 8
KERNEL = 3                   # config.RENDERER.kernel
NEIGH = KERNEL ** 3          # 27
OUTPUT_SCALE = 0.1           # config.RENDERER.output_scale
LRELU_SLOPE = 0.01           # torch.nn.LeakyReLU() default
LN_EPS = 1e-5                # torch.nn.LayerNorm default eps
HEAD_PAD = 8                 # pad the 2-row head matmul to 8 sublanes

# Static row offsets inside the packed weight slab (all multiples of 8) and bias column.
#   W1 (32,16) rows   0:32   layer1 on full [ctr | ctx]
#   W2C(16,16) rows  32:48   layer2 centre part, zero-extended to din=16
#   W2X(16,32) rows  48:64   layer2 on x1
#   W3C( 8,16) rows  64:72   layer3 centre part
#   W3X( 8,16) rows  72:80   layer3 on x2
#   W4C( 8,16) rows  80:88   layer4 centre part
#   W4X( 8, 8) rows  88:96   layer4 on x3
#   WH ( 8, 8) rows  96:104  [sdf | occ | zeros] head
W_ROWS, W_COLS = 104, 32
B_ROWS = 72                   # b1(32) b2(16) b3(8) b4(8) bh(8)


# ----------------------------- Pallas kernel --------------------------------
def _translator_kernel(x_ref, w_ref, b_ref, out_ref):
    """MLP over a (2*NF, TN) bf16 activation slab; columns = points (or voxels)."""
    bf16 = jnp.bfloat16
    x = x_ref[...]                                   # (16, TN) bf16: rows 0:8 ctr, 8:16 LN+lrelu ctx

    def lrelu(v):
        return jnp.maximum(v, LRELU_SLOPE * v)       # 2 VALU ops (mul+max)

    def mm(r0, r1, din, a):                          # (dout, din) @ (din, TN): bf16 in, f32 acc
        return jnp.dot(w_ref[r0:r1, :din].astype(bf16), a,
                       preferred_element_type=jnp.float32)

    x1 = lrelu(mm(0, 32, 16, x) + b_ref[0:32])                                   # (32, TN)
    x2 = lrelu(mm(32, 48, 16, x) + mm(48, 64, 32, x1.astype(bf16)) + b_ref[32:48])  # (16, TN)
    x3 = lrelu(mm(64, 72, 16, x) + mm(72, 80, 16, x2.astype(bf16)) + b_ref[48:56])  # (8, TN)
    x4 = lrelu(mm(80, 88, 16, x) + mm(88, 96, 8, x3.astype(bf16)) + b_ref[56:64])   # (8, TN)

    head = mm(96, 104, 8, x4.astype(bf16)) + b_ref[64:72]                        # (8, TN)
    out_ref[0:1, :] = OUTPUT_SCALE * jnp.tanh(head[0:1])                         # sdf row
    out_ref[1:2, :] = jax.nn.sigmoid(head[1:2])                                  # occ row


# ----------------------------- JAX glue -------------------------------------
def _round_up(v, m):
    return (v + m - 1) // m * m


def _voxel_table(grid, wc, bc):
    """Per-voxel [centre | lrelu(LN(layer_context1 linear))] table, shape (V, 2*NF), bf16.

    The context branch on the gathered 3x3x3 neighbourhood depends only on floor(point), so the
    linear, LayerNorm and LeakyReLU are all precomputed here (f32) once per grid.
    """
    g = grid[0, :NF]                                                   # drop the count channel
    _, D, H, W = g.shape
    gp = jnp.pad(g, ((0, 0), (1, 1), (1, 1), (1, 1)), mode='edge')     # ReplicationPad3d(1)
    shifts = [gp[:, di:di + D, dj:dj + H, dk:dk + W]                   # index_shift order (i,j,k)
              for di in range(KERNEL) for dj in range(KERNEL) for dk in range(KERNEL)]
    neigh = jnp.transpose(jnp.stack(shifts, axis=0), (2, 3, 4, 0, 1))  # (D, H, W, 27, NF)
    feats = neigh.reshape(D * H * W, NEIGH * NF)                       # neighbour-major flatten
    h = feats @ wc + bc                                                # (V, NF)
    mu = h.mean(-1, keepdims=True)
    var = ((h - mu) ** 2).mean(-1, keepdims=True)
    ctx = (h - mu) * lax.rsqrt(var + LN_EPS)                           # LayerNorm (no affine)
    ctx = jnp.maximum(ctx, LRELU_SLOPE * ctx)                          # LeakyReLU folded in
    center = jnp.transpose(g, (1, 2, 3, 0)).reshape(D * H * W, NF)     # (V, NF)
    return jnp.concatenate([center, ctx], axis=1).astype(jnp.bfloat16)  # (V, 2*NF) bf16


def _pack_params(p):
    """One f32 (104, 32) weight slab + one f32 (72, 1) bias column (kernel slices statically)."""
    def cpad(w, cols):                               # zero-pad columns (din) to `cols`
        return jnp.pad(w, ((0, 0), (0, cols - w.shape[1])))

    wh = jnp.pad(jnp.concatenate([p['ws'], p['wo']], axis=1), ((0, 0), (0, HEAD_PAD - 2)))
    blocks = [
        p['w1'].T,                                   # (32, 16)
        cpad(p['w2'][:NF].T, 16), p['w2'][NF:].T,    # (16, 16), (16, 32)
        cpad(p['w3'][:NF].T, 16), p['w3'][NF:].T,    # (8, 16),  (8, 16)
        cpad(p['w4'][:NF].T, 16), p['w4'][NF:].T,    # (8, 16),  (8, 8)
        wh.T,                                        # (8, 8)
    ]
    slab = jnp.zeros((W_ROWS, W_COLS), jnp.float32)
    r = 0
    for b in blocks:
        slab = slab.at[r:r + b.shape[0], :b.shape[1]].set(b.astype(jnp.float32))
        r += b.shape[0]
    bh = jnp.pad(jnp.concatenate([p['bs'], p['bo']]), (0, HEAD_PAD - 2))
    bias = jnp.concatenate([p['b1'], p['b2'], p['b3'], p['b4'], bh]).reshape(B_ROWS, 1)
    return slab, bias


def _run_mlp(cols, wslab, bias, tn):
    """cols: (2*NF, M) bf16 with M a multiple of tn.  Returns (2, M) f32 [sdf, occ]."""
    m = cols.shape[1]
    return pl.pallas_call(
        _translator_kernel,
        out_shape=jax.ShapeDtypeStruct((2, m), jnp.float32),
        grid_spec=pltpu.PrefetchScalarGridSpec(
            num_scalar_prefetch=0,
            grid=(m // tn,),
            in_specs=[pl.BlockSpec((2 * NF, tn), lambda i: (0, i)),
                      pl.BlockSpec((W_ROWS, W_COLS), lambda i: (0, 0)),
                      pl.BlockSpec((B_ROWS, 1), lambda i: (0, 0))],
            out_specs=pl.BlockSpec((2, tn), lambda i: (0, i)),
        ),
        compiler_params=pltpu.CompilerParams(
            dimension_semantics=("parallel",)),
    )(cols, wslab, bias)


@functools.partial(jax.jit, static_argnames=("tn",))
def translator_forward(points, grid, params, tn=4096):
    n = points.shape[0]
    _, _, D, H, W = grid.shape
    v = D * H * W

    table = _voxel_table(grid, params['wc'], params['bc'])             # (V, 2*NF) bf16
    wslab, bias = _pack_params(params)

    idx = jnp.clip(jnp.floor(points).astype(jnp.int32), 0,
                   jnp.array([D - 1, H - 1, W - 1], jnp.int32))        # == floor(points+pad)-pad
    lin = (idx[:, 0] * H + idx[:, 1]) * W + idx[:, 2]                  # (N,) linear voxel index

    def tile(m):                                     # lane-dense tile; keep >= 2 grid steps
        m_lane = _round_up(max(m, 1), 128)
        t = max(128, min(tn, _round_up((m_lane + 1) // 2, 128)))
        return t, _round_up(m, t)

    if n >= v:
        # Output is a pure function of floor(point): run the MLP once per voxel, then each
        # point is just an 8-byte gather of its (sdf, occ) row.
        t, v_pad = tile(v)
        cols = jnp.pad(table, ((0, v_pad - v), (0, 0))).T              # (2*NF, V_pad) bf16
        out_v = _run_mlp(cols, wslab, bias, t)                         # (2, V_pad)
        return jnp.take(out_v, lin, axis=1).T                          # (N, 2): [sdf, occ]

    # Grid larger than the point set: per-point path (32 B/point bf16 stream into the kernel).
    t, n_pad = tile(n)
    lin_p = jnp.pad(lin, (0, n_pad - n))                               # pad indices, not features
    cols = jnp.take(table, lin_p, axis=0).T                            # (2*NF, n_pad) bf16
    out = _run_mlp(cols, wslab, bias, t)                               # (2, n_pad)
    return out[:, :n].T                                                # (N, 2): [sdf, occ]


# ----------------------------- params ---------------------------------------
def init_params(key):
    ks = jax.random.split(key, 7)

    def lin(k, din, dout):
        kw, kb = jax.random.split(k)
        bound = 1.0 / jnp.sqrt(jnp.float32(din))
        w = jax.random.uniform(kw, (din, dout), jnp.float32, -bound, bound)
        b = jax.random.uniform(kb, (dout,), jnp.float32, -bound, bound)
        return w, b

    p = {}
    p['wc'], p['bc'] = lin(ks[0], NEIGH * NF, NF)      # layer_context1 linear
    p['w1'], p['b1'] = lin(ks[1], NF + NF, 32)
    p['w2'], p['b2'] = lin(ks[2], NF + 32, 16)
    p['w3'], p['b3'] = lin(ks[3], NF + 16, 8)
    p['w4'], p['b4'] = lin(ks[4], NF + 8, NF)
    p['ws'], p['bs'] = lin(ks[5], NF, 1)               # sdf head
    p['wo'], p['bo'] = lin(ks[6], NF, 1)               # occ head
    return p


# ----------------------------- reference ------------------------------------
@jax.jit
def reference_forward(points, grid, p):
    """Full-precision f32 replica of the torch forward (independent 27-neighbourhood gather)."""
    gp = jnp.pad(grid, ((0, 0), (0, 0), (1, 1), (1, 1), (1, 1)), mode='edge')
    pts = points + float(KERNEL // 2)
    idx = jnp.floor(pts).astype(jnp.int32)
    offs = jnp.array([(i, j, k) for i in (-1, 0, 1) for j in (-1, 0, 1) for k in (-1, 0, 1)],
                     dtype=jnp.int32)                                  # torch index_shift order
    nb = idx[:, None, :] + offs[None]
    g = gp[0]
    feats = g[:, nb[..., 0], nb[..., 1], nb[..., 2]]                   # (C, N, 27)
    feats = jnp.transpose(feats, (1, 2, 0))[..., :NF].reshape(points.shape[0], NEIGH * NF)
    ctr = g[:, idx[:, 0], idx[:, 1], idx[:, 2]].T[:, :NF]

    def lrelu(v):
        return jnp.where(v > 0, v, LRELU_SLOPE * v)

    h = feats @ p['wc'] + p['bc']
    mu = h.mean(-1, keepdims=True)
    var = ((h - mu) ** 2).mean(-1, keepdims=True)
    ctx = lrelu((h - mu) / jnp.sqrt(var + LN_EPS))
    x = lrelu(jnp.concatenate([ctr, ctx], 1) @ p['w1'] + p['b1'])
    x = lrelu(jnp.concatenate([ctr, x], 1) @ p['w2'] + p['b2'])
    x = lrelu(jnp.concatenate([ctr, x], 1) @ p['w3'] + p['b3'])
    x = lrelu(jnp.concatenate([ctr, x], 1) @ p['w4'] + p['b4'])
    sdf = OUTPUT_SCALE * jnp.tanh(x @ p['ws'] + p['bs'])
    occ = jax.nn.sigmoid(x @ p['wo'] + p['bo'])
    return jnp.concatenate([sdf, occ], axis=1)


# ----------------------------- main ------------------------------------------
if __name__ == "__main__":
    key = jax.random.PRNGKey(0)
    k_pts, k_grid, k_grid2, k_par = jax.random.split(key, 4)

    N_POINTS = 2000            # not a multiple of the point tile -> exercises padding
    C = N_FEATURES_CFG         # 9 raw grid channels (last one is the dropped count channel)
    params = init_params(k_par)

    # Case 1: N >= V (8^3 = 512 voxels) -> per-voxel MLP + 8-byte per-point gather.
    D1 = 8
    points1 = jax.random.uniform(k_pts, (N_POINTS, 3), jnp.float32,
                                 minval=0.0, maxval=float(D1) - 1e-3)
    grid1 = jax.random.normal(k_grid, (1, C, D1, D1, D1), jnp.float32)

    # Case 2: N < V (16^3 = 4096 voxels) -> per-point path (bf16 gathered slab into the kernel).
    D2 = 16
    points2 = points1 * (float(D2) / float(D1))
    grid2 = jax.random.normal(k_grid2, (1, C, D2, D2, D2), jnp.float32)

    for points, grid in ((points1, grid1), (points2, grid2)):
        out = translator_forward(points, grid, params)       # (N, 2): [sdf, occ]
        out = jax.block_until_ready(out)
        assert out.shape == (N_POINTS, 2)
        ref = reference_forward(points, grid, params)
        max_err = float(jnp.max(jnp.abs(out - ref)))
        assert jnp.allclose(out, ref, atol=1e-2, rtol=1e-2), (
            f"mismatch vs JAX reference, max abs err {max_err:.3e}")

    print("KERNEL_OK")
</pallas_src>

<mosaic_0001>
module attributes {stable_mosaic.version = 11 : i64} {
  func.func @_translator_kernel(%arg0: i32, %arg1: memref<16x256xbf16, #tpu.memory_space<vmem>>, %arg2: memref<104x32xf32, #tpu.memory_space<vmem>>, %arg3: memref<72x1xf32, #tpu.memory_space<vmem>>, %arg4: memref<2x256xf32, #tpu.memory_space<vmem>>) attributes {dimension_semantics = [#tpu.dimension_semantics<parallel>], iteration_bounds = array<i64: 2>, scalar_prefetch = 0 : i64, scratch_operands = 0 : i64, tpu.core_type = #tpu.core_type<tc>, window_params = [{transform_indices = @transform_0, window_bounds = array<i64: 16, 256>}, {pipeline_mode = #tpu.pipeline_mode<synchronous>, transform_indices = @transform_1, window_bounds = array<i64: 104, 32>}, {pipeline_mode = #tpu.pipeline_mode<synchronous>, transform_indices = @transform_2, window_bounds = array<i64: 72, 1>}, {transform_indices = @transform_3, window_bounds = array<i64: 2, 256>}]} {
    %c0 = arith.constant 0 : index
    %c0_0 = arith.constant 0 : index
    %0 = vector.load %arg1[%c0, %c0_0] : memref<16x256xbf16, #tpu.memory_space<vmem>>, vector<16x256xbf16>
    %c0_1 = arith.constant 0 : index
    %c0_2 = arith.constant 0 : index
    %1 = vector.load %arg2[%c0_1, %c0_2] : memref<104x32xf32, #tpu.memory_space<vmem>>, vector<32x16xf32>
    %2 = arith.truncf %1 : vector<32x16xf32> to vector<32x16xbf16>
    %cst = arith.constant dense<0.000000e+00> : vector<32x256xf32>
    %3 = tpu.matmul %2, %0, %cst {dimension_numbers = #tpu.dot_dimension_numbers<[1], [0], [0], [1], [0, 0, 1, 1], [], []>} : vector<32x16xbf16>, vector<16x256xbf16>, vector<32x256xf32> -> vector<32x256xf32>
    %c0_3 = arith.constant 0 : index
    %c0_4 = arith.constant 0 : index
    %4 = vector.load %arg3[%c0_3, %c0_4] : memref<72x1xf32, #tpu.memory_space<vmem>>, vector<32x1xf32>
    %5 = vector.broadcast %4 : vector<32x1xf32> to vector<32x256xf32>
    %6 = arith.addf %3, %5 : vector<32x256xf32>
    %cst_5 = arith.constant 0.00999999977 : f32
    %7 = vector.broadcast %cst_5 : f32 to vector<32x256xf32>
    %8 = arith.mulf %7, %6 : vector<32x256xf32>
    %9 = arith.maximumf %6, %8 : vector<32x256xf32>
    %c32 = arith.constant 32 : index
    %c0_6 = arith.constant 0 : index
    %10 = vector.load %arg2[%c32, %c0_6] : memref<104x32xf32, #tpu.memory_space<vmem>>, vector<16x16xf32>
    %11 = arith.truncf %10 : vector<16x16xf32> to vector<16x16xbf16>
    %cst_7 = arith.constant dense<0.000000e+00> : vector<16x256xf32>
    %12 = tpu.matmul %11, %0, %cst_7 {dimension_numbers = #tpu.dot_dimension_numbers<[1], [0], [0], [1], [0, 0, 1, 1], [], []>} : vector<16x16xbf16>, vector<16x256xbf16>, vector<16x256xf32> -> vector<16x256xf32>
    %13 = arith.truncf %9 : vector<32x256xf32> to vector<32x256xbf16>
    %c48 = arith.constant 48 : index
    %c0_8 = arith.constant 0 : index
    %14 = vector.load %arg2[%c48, %c0_8] : memref<104x32xf32, #tpu.memory_space<vmem>>, vector<16x32xf32>
    %15 = arith.truncf %14 : vector<16x32xf32> to vector<16x32xbf16>
    %cst_9 = arith.constant dense<0.000000e+00> : vector<16x256xf32>
    %16 = tpu.matmul %15, %13, %cst_9 {dimension_numbers = #tpu.dot_dimension_numbers<[1], [0], [0], [1], [0, 0, 1, 1], [], []>} : vector<16x32xbf16>, vector<32x256xbf16>, vector<16x256xf32> -> vector<16x256xf32>
    %17 = arith.addf %12, %16 : vector<16x256xf32>
    %c32_10 = arith.constant 32 : index
    %c0_11 = arith.constant 0 : index
    %18 = vector.load %arg3[%c32_10, %c0_11] : memref<72x1xf32, #tpu.memory_space<vmem>>, vector<16x1xf32>
    %19 = vector.broadcast %18 : vector<16x1xf32> to vector<16x256xf32>
    %20 = arith.addf %17, %19 : vector<16x256xf32>
    %cst_12 = arith.constant 0.00999999977 : f32
    %21 = vector.broadcast %cst_12 : f32 to vector<16x256xf32>
    %22 = arith.mulf %21, %20 : vector<16x256xf32>
    %23 = arith.maximumf %20, %22 : vector<16x256xf32>
    %c64 = arith.constant 64 : index
    %c0_13 = arith.constant 0 : index
    %24 = vector.load %arg2[%c64, %c0_13] : memref<104x32xf32, #tpu.memory_space<vmem>>, vector<8x16xf32>
    %25 = arith.truncf %24 : vector<8x16xf32> to vector<8x16xbf16>
    %cst_14 = arith.constant dense<0.000000e+00> : vector<8x256xf32>
    %26 = tpu.matmul %25, %0, %cst_14 {dimension_numbers = #tpu.dot_dimension_numbers<[1], [0], [0], [1], [0, 0, 1, 1], [], []>} : vector<8x16xbf16>, vector<16x256xbf16>, vector<8x256xf32> -> vector<8x256xf32>
    %27 = arith.truncf %23 : vector<16x256xf32> to vector<16x256xbf16>
    %c72 = arith.constant 72 : index
    %c0_15 = arith.constant 0 : index
    %28 = vector.load %arg2[%c72, %c0_15] : memref<104x32xf32, #tpu.memory_space<vmem>>, vector<8x16xf32>
    %29 = arith.truncf %28 : vector<8x16xf32> to vector<8x16xbf16>
    %cst_16 = arith.constant dense<0.000000e+00> : vector<8x256xf32>
    %30 = tpu.matmul %29, %27, %cst_16 {dimension_numbers = #tpu.dot_dimension_numbers<[1], [0], [0], [1], [0, 0, 1, 1], [], []>} : vector<8x16xbf16>, vector<16x256xbf16>, vector<8x256xf32> -> vector<8x256xf32>
    %31 = arith.addf %26, %30 : vector<8x256xf32>
    %c48_17 = arith.constant 48 : index
    %c0_18 = arith.constant 0 : index
    %32 = vector.load %arg3[%c48_17, %c0_18] : memref<72x1xf32, #tpu.memory_space<vmem>>, vector<8x1xf32>
    %33 = vector.broadcast %32 : vector<8x1xf32> to vector<8x256xf32>
    %34 = arith.addf %31, %33 : vector<8x256xf32>
    %cst_19 = arith.constant 0.00999999977 : f32
    %35 = vector.broadcast %cst_19 : f32 to vector<8x256xf32>
    %36 = arith.mulf %35, %34 : vector<8x256xf32>
    %37 = arith.maximumf %34, %36 : vector<8x256xf32>
    %c80 = arith.constant 80 : index
    %c0_20 = arith.constant 0 : index
    %38 = vector.load %arg2[%c80, %c0_20] : memref<104x32xf32, #tpu.memory_space<vmem>>, vector<8x16xf32>
    %39 = arith.truncf %38 : vector<8x16xf32> to vector<8x16xbf16>
    %cst_21 = arith.constant dense<0.000000e+00> : vector<8x256xf32>
    %40 = tpu.matmul %39, %0, %cst_21 {dimension_numbers = #tpu.dot_dimension_numbers<[1], [0], [0], [1], [0, 0, 1, 1], [], []>} : vector<8x16xbf16>, vector<16x256xbf16>, vector<8x256xf32> -> vector<8x256xf32>
    %41 = arith.truncf %37 : vector<8x256xf32> to vector<8x256xbf16>
    %c88 = arith.constant 88 : index
    %c0_22 = arith.constant 0 : index
    %42 = vector.load %arg2[%c88, %c0_22] : memref<104x32xf32, #tpu.memory_space<vmem>>, vector<8x8xf32>
    %43 = arith.truncf %42 : vector<8x8xf32> to vector<8x8xbf16>
    %cst_23 = arith.constant dense<0.000000e+00> : vector<8x256xf32>
    %44 = tpu.matmul %43, %41, %cst_23 {dimension_numbers = #tpu.dot_dimension_numbers<[1], [0], [0], [1], [0, 0, 1, 1], [], []>} : vector<8x8xbf16>, vector<8x256xbf16>, vector<8x256xf32> -> vector<8x256xf32>
    %45 = arith.addf %40, %44 : vector<8x256xf32>
    %c56 = arith.constant 56 : index
    %c0_24 = arith.constant 0 : index
    %46 = vector.load %arg3[%c56, %c0_24] : memref<72x1xf32, #tpu.memory_space<vmem>>, vector<8x1xf32>
    %47 = vector.broadcast %46 : vector<8x1xf32> to vector<8x256xf32>
    %48 = arith.addf %45, %47 : vector<8x256xf32>
    %cst_25 = arith.constant 0.00999999977 : f32
    %49 = vector.broadcast %cst_25 : f32 to vector<8x256xf32>
    %50 = arith.mulf %49, %48 : vector<8x256xf32>
    %51 = arith.maximumf %48, %50 : vector<8x256xf32>
    %52 = arith.truncf %51 : vector<8x256xf32> to vector<8x256xbf16>
    %c96 = arith.constant 96 : index
    %c0_26 = arith.constant 0 : index
    %53 = vector.load %arg2[%c96, %c0_26] : memref<104x32xf32, #tpu.memory_space<vmem>>, vector<8x8xf32>
    %54 = arith.truncf %53 : vector<8x8xf32> to vector<8x8xbf16>
    %cst_27 = arith.constant dense<0.000000e+00> : vector<8x256xf32>
    %55 = tpu.matmul %54, %52, %cst_27 {dimension_numbers = #tpu.dot_dimension_numbers<[1], [0], [0], [1], [0, 0, 1, 1], [], []>} : vector<8x8xbf16>, vector<8x256xbf16>, vector<8x256xf32> -> vector<8x256xf32>
    %c64_28 = arith.constant 64 : index
    %c0_29 = arith.constant 0 : index
    %56 = vector.load %arg3[%c64_28, %c0_29] : memref<72x1xf32, #tpu.memory_space<vmem>>, vector<8x1xf32>
    %57 = vector.broadcast %56 : vector<8x1xf32> to vector<8x256xf32>
    %58 = arith.addf %55, %57 : vector<8x256xf32>
    %59 = vector.extract_strided_slice %58 {offsets = [0, 0], sizes = [1, 256], strides = [1, 1]} : vector<8x256xf32> to vector<1x256xf32>
    %60 = math.tanh %59 : vector<1x256xf32>
    %cst_30 = arith.constant 1.000000e-01 : f32
    %61 = vector.broadcast %cst_30 : f32 to vector<1x256xf32>
    %62 = arith.mulf %61, %60 : vector<1x256xf32>
    %c0_31 = arith.constant 0 : index
    %c0_32 = arith.constant 0 : index
    %63 = vector.load %arg4[%c0_31, %c0_32] : memref<2x256xf32, #tpu.memory_space<vmem>>, vector<1x256xf32>
    tpu.vector_store %arg4[%c0_31, %c0_32], %62 {strides = array<i32>} : memref<2x256xf32, #tpu.memory_space<vmem>>, vector<1x256xf32>,
    %64 = vector.extract_strided_slice %58 {offsets = [1, 0], sizes = [1, 256], strides = [1, 1]} : vector<8x256xf32> to vector<1x256xf32>
    %65 = arith.negf %64 : vector<1x256xf32>
    %66 = math.exp %65 : vector<1x256xf32>
    %cst_33 = arith.constant 1.000000e+00 : f32
    %67 = vector.broadcast %cst_33 : f32 to vector<1x256xf32>
    %68 = arith.addf %67, %66 : vector<1x256xf32>
    %69 = arith.divf %67, %68 : vector<1x256xf32>
    %c1 = arith.constant 1 : index
    %c0_34 = arith.constant 0 : index
    %70 = vector.load %arg4[%c1, %c0_34] : memref<2x256xf32, #tpu.memory_space<vmem>>, vector<1x256xf32>
    tpu.vector_store %arg4[%c1, %c0_34], %69 {strides = array<i32>} : memref<2x256xf32, #tpu.memory_space<vmem>>, vector<1x256xf32>,
    return
  }
  func.func @transform_0(%arg0: i32) -> (i32, i32) {
    %c0_i32 = arith.constant 0 : i32
    %c0_i32_0 = arith.constant 0 : i32
    return %c0_i32, %arg0 : i32, i32
  }
  func.func @transform_1(%arg0: i32) -> (i32, i32) {
    %c0_i32 = arith.constant 0 : i32
    %c0_i32_0 = arith.constant 0 : i32
    %c0_i32_1 = arith.constant 0 : i32
    return %c0_i32, %c0_i32_0 : i32, i32
  }
  func.func @transform_2(%arg0: i32) -> (i32, i32) {
    %c0_i32 = arith.constant 0 : i32
    %c0_i32_0 = arith.constant 0 : i32
    %c0_i32_1 = arith.constant 0 : i32
    return %c0_i32, %c0_i32_0 : i32, i32
  }
  func.func @transform_3(%arg0: i32) -> (i32, i32) {
    %c0_i32 = arith.constant 0 : i32
    %c0_i32_0 = arith.constant 0 : i32
    return %c0_i32, %arg0 : i32, i32
  }
}

</mosaic_0001>

<llo_original>
// kernel: translator_forward.1
$region0: #{translator_forward.1}
  #allocation0 [shape = 'u32[]', space=smem, size = 0x4, offset = 0x4, fixed_abs, tag = 'smem constant byte address 0x4 - core index']
  #allocation1 [shape = 'u32[72,128]{1,0:T(1,128)}', space=vmem, size = 0x9000, scoped, tag = 'internal scratch']
  %s0 = inlined_call_operand.vmem [shape: bf16[16,512], index: 0, kind: input, shape index: {}]
  %s1 = inlined_call_operand.vmem [shape: f32[104,32], index: 1, kind: input, shape index: {}]
  %s2 = inlined_call_operand.vmem [shape: f32[72,1], index: 2, kind: input, shape index: {}]
  %s3 = inlined_call_operand.vmem [shape: f32[2,512], index: 3, kind: output, shape index: {}]
  %s4 = sld [smem:[#allocation0]]
  $region83: #{translator_forward.1} parent=0
    _
  %s6 = ssub.s32 1, %s4
  %s7 = scalar_select 0, %s6, %s4
  $region1: #{translator_forward.1} parent=0
    #allocation2 [shape = 'u8[16384]{0}', space=vmem, size = 0x4000, scoped, tag = 'input window, operand 0']
    loop: start=0, step=1, limit=4
    $region2: #{translator_forward.1} parent=1 // loop_pre_header
      _
    $region3: #{translator_forward.1} parent=1 // loop_header
      %s9 = sphi 0, %s13
      %p10 = scmp.ge.s32.totalorder %s9, 4
      %s19 = sphi 0, %s21
      %s22 = sphi 0, %s19
      %s23 = sphi 0, %s22
      %s39 = sphi 0, %s23
      %s43 = sphi 0, %s43
      %s45 = sphi 0, %s43
      %s46 = sphi 0, %s45
      %s60 = sphi 0, %s46
      %s64 = sphi 0, %s64
      %s66 = sphi 0, %s64
      %s67 = sphi 0, %s66
      %s81 = sphi 0, %s67
      %s87 = sphi 0, %s89
      %s90 = sphi 0, %s87
      %s91 = sphi 0, %s90
      %s107 = sphi 0, %s91
    $region4: #{translator_forward.1} parent=1 // loop_header_branch
      %12 = sbr.rel (%p10) target = $region8
    $region5: #{translator_forward.1} parent=1 // loop_body
      %s14 = ssub.s32 %s9, 1
      %s15 = ssub.s32 %s9, 2
      %s16 = sadd.s32 %s9, 1
      %s17 = ssub.s32 %s9, %s16
      %p18 = scmp.eq.s32.totalorder %s17, 0
      %s20 = sadd.s32 %s19, 1
      %s21 = scalar_select %p18, %s19, %s20
      %p24 = pneg %p18
      %p25 = scmp.eq.s32.totalorder %s9, 1
      %p26 = por %p24, %p25
      %p27 = scmp.ne.s32.totalorder %s19, %s22
      %p28 = scmp.eq.s32.totalorder %s9, 0
      %p29 = por %p27, %p28
      %p30 = scmp.ne.s32.totalorder %s19, %s22
      %p31 = scmp.eq.s32.totalorder %s14, 1
      %p32 = por %p30, %p31
      %p33 = scmp.ne.s32.totalorder %s22, %s23
      %p34 = scmp.eq.s32.totalorder %s14, 0
      %p35 = por %p33, %p34
      %p36 = scmp.ne.s32.totalorder %s22, %s23
      %p37 = scmp.eq.s32.totalorder %s15, 1
      %p38 = por %p36, %p37
      %p40 = scmp.ne.s32.totalorder %s23, %s39
      %p41 = scmp.eq.s32.totalorder %s15, 0
      %p42 = por %p40, %p41
      %s44 = sadd.s32 %s43, 1
      %p47 = scmp.eq.s32.totalorder %s9, 1
      %p48 = scmp.ne.s32.totalorder %s43, %s45
      %p49 = scmp.eq.s32.totalorder %s9, 0
      %p50 = por %p48, %p49
      %p51 = scmp.ne.s32.totalorder %s43, %s45
      %p52 = scmp.eq.s32.totalorder %s14, 1
      %p53 = por %p51, %p52
      %p54 = scmp.ne.s32.totalorder %s45, %s46
      %p55 = scmp.eq.s32.totalorder %s14, 0
      %p56 = por %p54, %p55
      %p57 = scmp.ne.s32.totalorder %s45, %s46
      %p58 = scmp.eq.s32.totalorder %s15, 1
      %p59 = por %p57, %p58
      %p61 = scmp.ne.s32.totalorder %s46, %s60
      %p62 = scmp.eq.s32.totalorder %s15, 0
      %p63 = por %p61, %p62
      %s65 = sadd.s32 %s64, 1
      %p68 = scmp.eq.s32.totalorder %s9, 1
      %p69 = scmp.ne.s32.totalorder %s64, %s66
      %p70 = scmp.eq.s32.totalorder %s9, 0
      %p71 = por %p69, %p70
      %p72 = scmp.ne.s32.totalorder %s64, %s66
      %p73 = scmp.eq.s32.totalorder %s14, 1
      %p74 = por %p72, %p73
      %p75 = scmp.ne.s32.totalorder %s66, %s67
      %p76 = scmp.eq.s32.totalorder %s14, 0
      %p77 = por %p75, %p76
      %p78 = scmp.ne.s32.totalorder %s66, %s67
      %p79 = scmp.eq.s32.totalorder %s15, 1
      %p80 = por %p78, %p79
      %p82 = scmp.ne.s32.totalorder %s67, %s81
      %p83 = scmp.eq.s32.totalorder %s15, 0
      %p84 = por %p82, %p83
      %s85 = ssub.s32 %s9, %s16
      %p86 = scmp.eq.s32.totalorder %s85, 0
      %s88 = sadd.s32 %s87, 1
      %s89 = scalar_select %p86, %s87, %s88
      %p92 = pneg %p86
      %p93 = scmp.eq.s32.totalorder %s9, 1
      %p94 = por %p92, %p93
      %p95 = scmp.ne.s32.totalorder %s87, %s90
      %p96 = scmp.eq.s32.totalorder %s9, 0
      %p97 = por %p95, %p96
      %p98 = scmp.ne.s32.totalorder %s87, %s90
      %p99 = scmp.eq.s32.totalorder %s14, 1
      %p100 = por %p98, %p99
      %p101 = scmp.ne.s32.totalorder %s90, %s91
      %p102 = scmp.eq.s32.totalorder %s14, 0
      %p103 = por %p101, %p102
      %p104 = scmp.ne.s32.totalorder %s90, %s91
      %p105 = scmp.eq.s32.totalorder %s15, 1
      %p106 = por %p104, %p105
      %p108 = scmp.ne.s32.totalorder %s91, %s107
      %p109 = scmp.eq.s32.totalorder %s15, 0
      %p110 = por %p108, %p109
      %p111 = scmp.le.s32.totalorder 1, %s9
      %p112 = scmp.lt.s32.totalorder %s9, 3
      %p113 = pnand %p111, %p112
      %p114 = pneg %p113
      // Predicated region
      $region9: #{translator_forward.1} parent=5 // pred_check
        _
      $region10: #{translator_forward.1} parent=5 // pred_check_branch
        %116 = sbr.rel (%p113) target = $region12
      $region11: #{translator_forward.1} parent=5 // pred_region
        %s117 = ssub.s32 %s9, 1
        // Predicated region
        $region13: #{translator_forward.1} parent=11 // pred_check
          %p118 = pneg %p56
        $region14: #{translator_forward.1} parent=11 // pred_check_branch
          %120 = sbr.rel (%p118) target = $region16
        $region15: #{translator_forward.1} parent=11 // pred_region
          _
        $region16: #{translator_forward.1} parent=11 // pred_fallthru
          _
        // Predicated region
        $region17: #{translator_forward.1} parent=11 // pred_check
          %p121 = pneg %p77
        $region18: #{translator_forward.1} parent=11 // pred_check_branch
          %123 = sbr.rel (%p121) target = $region20
        $region19: #{translator_forward.1} parent=11 // pred_region
          _
        $region20: #{translator_forward.1} parent=11 // pred_fallthru
          _
      $region12: #{translator_forward.1} parent=5 // pred_fallthru
        _
      %p124 = scmp.lt.s32.totalorder %s9, 2
      // Predicated region
      $region21: #{translator_forward.1} parent=5 // pred_check
        %p125 = pneg %p124
      $region22: #{translator_forward.1} parent=5 // pred_check_branch
        %127 = sbr.rel (%p125) target = $region24
      $region23: #{translator_forward.1} parent=5 // pred_region
        // Predicated region
        $region25: #{translator_forward.1} parent=23 // pred_check
          %p128 = pneg %p29
        $region26: #{translator_forward.1} parent=23 // pred_check_branch
          %130 = sbr.rel (%p128) target = $region28
        $region27: #{translator_forward.1} parent=23 // pred_region
          %s131 = sand.u32 %s19, 1
          %s132 = sand.u32 %s19, 1
          %s133 = smul.addr %s132, 16
          %s134 = scalar_lea.vmem [#allocation2], %s133
          %s135 = smul.u32 2, %s9
          %s136 = smul.addr %s135, 4
          %s137 = scalar_lea.vmem %s0, %s136
          // Predicated region
          $region29: #{translator_forward.1} parent=27 // pred_check
            _
          $region30: #{translator_forward.1} parent=27 // pred_check_branch
            %139 = sbr.rel (0) target = $region32
          $region31: #{translator_forward.1} parent=27 // pred_region
            // Predicated region
            $region33: #{translator_forward.1} parent=31 // pred_check
              _
            $region34: #{translator_forward.1} parent=31 // pred_check_branch
              %141 = sbr.rel (0) target = $region36
            $region35: #{translator_forward.1} parent=31 // pred_region
              // Predicated region
              $region48: #{translator_forward.1} parent=35 // pred_check
                _
              $region49: #{translator_forward.1} parent=35 // pred_check_branch
                %159 = sbr.rel (0) target = $region51
              $region50: #{translator_forward.1} parent=35 // pred_region
                loop: start=0, step=1, limit=1
                $region52: #{translator_forward.1} parent=50 // loop_pre_header
                  _
                $region53: #{translator_forward.1} parent=50 // loop_header
                  %s161 = sphi 0, %s165
                  %p162 = scmp.ge.s32.totalorder %s161, 1
                  %s166 = sphi %s137, %s137
                  %s167 = sphi %s134, %s134
                $region54: #{translator_forward.1} parent=50 // loop_header_branch
                  %164 = sbr.rel (%p162) target = $region58
                $region55: #{translator_forward.1} parent=50 // loop_body
                  %v168 = vld [vmem:[%s166] sm:$0xff]
                  %169 = vst [vmem:[%s167] sm:$0xff] %v168
                  %v170 = vld [vmem:[%s166 + $0x10] sm:$0xff]
                  %171 = vst [vmem:[%s167 + $0x8] sm:$0xff] %v170
                $region56: #{translator_forward.1} parent=50 // loop_footer
                  %s165 = sadd.s32 1, %s161
                $region57: #{translator_forward.1} parent=50 // loop_footer_branch
                  %160 = sbr.rel target = $region53
                $region58: #{translator_forward.1} parent=50 // loop_exit
                  _
              $region51: #{translator_forward.1} parent=35 // pred_fallthru
                _
              // Predicated region
              $region59: #{translator_forward.1} parent=35 // pred_check
                _
              $region60: #{translator_forward.1} parent=35 // pred_check_branch
                %173 = sbr.rel target = $region62
              $region61: #{translator_forward.1} parent=35 // pred_region
                _
              $region62: #{translator_forward.1} parent=35 // pred_fallthru
                _
            $region36: #{translator_forward.1} parent=31 // pred_fallthru
              _
            // Predicated region
            $region37: #{translator_forward.1} parent=31 // pred_check
              _
            $region38: #{translator_forward.1} parent=31 // pred_check_branch
              %143 = sbr.rel target = $region40
            $region39: #{translator_forward.1} parent=31 // pred_region
              %s145 = ssub.s32 256, 1
              loop: start=0, step=1, limit=1
              $region41: #{translator_forward.1} parent=39 // loop_pre_header
                _
              $region42: #{translator_forward.1} parent=39 // loop_header
                %s147 = sphi 0, %s151
                %p148 = scmp.ge.s32.totalorder %s147, 1
                %s152 = sphi %s137, %s137
                %s153 = sphi %s134, %s134
              $region43: #{translator_forward.1} parent=39 // loop_header_branch
                %150 = sbr.rel (%p148) target = $region47
              $region44: #{translator_forward.1} parent=39 // loop_body
                %v154 = vld [vmem:[%s152] sm:%s145]
                %155 = vst [vmem:[%s153] sm:%s145] %v154
                %v156 = vld [vmem:[%s152 + $0x10] sm:%s145]
                %157 = vst [vmem:[%s153 + $0x8] sm:%s145] %v156
              $region45: #{translator_forward.1} parent=39 // loop_footer
                %s151 = sadd.s32 1, %s147
              $region46: #{translator_forward.1} parent=39 // loop_footer_branch
                %146 = sbr.rel target = $region42
              $region47: #{translator_forward.1} parent=39 // loop_exit
                _
            $region40: #{translator_forward.1} parent=31 // pred_fallthru
              _
          $region32: #{translator_forward.1} parent=27 // pred_fallthru
            _
          %174 = vnop
        $region28: #{translator_forward.1} parent=23 // pred_fallthru
          _
      $region24: #{translator_forward.1} parent=5 // pred_fallthru
        _
      %p175 = scmp.le.s32.totalorder 1, %s9
      %p176 = scmp.lt.s32.totalorder %s9, 3
      %p177 = pnand %p175, %p176
      %p178 = pneg %p177
      // Predicated region
      $region63: #{translator_forward.1} parent=5 // pred_check
        _
      $region64: #{translator_forward.1} parent=5 // pred_check_branch
        %180 = sbr.rel (%p177) target = $region66
      $region65: #{translator_forward.1} parent=5 // pred_region
        %s181 = ssub.s32 %s9, 1
        %s182 = sand.u32 %s22, 1
        %s183 = sand.u32 %s22, 1
        %s184 = smul.addr %s183, 16
        %s185 = scalar_lea.vmem [#allocation2], %s184
        // Predicated region
        $region67: #{translator_forward.1} parent=65 // pred_check
          %p186 = pneg %p35
        $region68: #{translator_forward.1} parent=65 // pred_check_branch
          %188 = sbr.rel (%p186) target = $region70
        $region69: #{translator_forward.1} parent=65 // pred_region
          _
        $region70: #{translator_forward.1} parent=65 // pred_fallthru
          _
        %s189 = sand.u32 %s22, 1
        %s190 = sand.u32 %s22, 1
        %s191 = smul.addr %s190, 16
        %s192 = scalar_lea.vmem [#allocation2], %s191
        %p193 = pneg %p35
        %p194 = pneg %p32
        %p195 = pneg %p56
        %p196 = pneg %p53
        %p197 = pneg %p77
        %p198 = pneg %p74
        %p199 = pneg %p103
        %p200 = pneg %p100
        %s201 = smul.u32 2, %s14
        %p202 = scmp.lt.s32.totalorder %s201, 3
        %s203 = scalar_select %p202, %s201, 3
        %s204 = smul.addr %s203, 2
        %s205 = scalar_lea.vmem %s3, %s204
        %s206 = smul.u32 2, %s14
        %s207 = smul.u32 2, %s14
        %p208 = scmp.lt.s32.totalorder %s207, 3
        %s209 = scalar_select %p208, %s207, 3
        %s210 = smul.addr %s209, 2
        %s211 = scalar_lea.vmem %s3, %s210
        %s212 = smul.u32 2, %s14
        %v214 = vld [vmem:[%s185] sm:$0xff]
        %v215 = vld [vmem:[%s185 + $0x8] sm:$0xff]
        %v216 = vld [vmem:[%s1] sm:$0xff]
        %v217 = vld [vmem:[%s1 + $0x8] sm:$0xff]
        %v218 = vld [vmem:[%s1 + $0x10] sm:$0xff]
        %v219 = vld [vmem:[%s1 + $0x18] sm:$0xff]
        %v220 = vpack.c.bf16 %v217, %v216
        %v221 = vpack.c.bf16 %v219, %v218
        %v222 = vld [vmem:[%s2] sm:$0xff]
        %v223 = vld [vmem:[%s2 + $0x8] sm:$0xff]
        %v224 = vld [vmem:[%s2 + $0x10] sm:$0xff]
        %v225 = vld [vmem:[%s2 + $0x18] sm:$0xff]
        %227 = vset.pattern.permute.xlu0 0
        %228 = vperm.xlu0 %227, %v222
        %v229 = vpop.permute.xlu0 %228
        %232 = vset.pattern.permute.xlu0 0
        %233 = vperm.xlu0 %232, %v223
        %v234 = vpop.permute.xlu0 %233
        %237 = vset.pattern.permute.xlu0 0
        %238 = vperm.xlu0 %237, %v224
        %v239 = vpop.permute.xlu0 %238
        %242 = vset.pattern.permute.xlu0 0
        %243 = vperm.xlu0 %242, %v225
        %v244 = vpop.permute.xlu0 %243
        %v248 = vunpack.c.l.b16 %v214
        %v249 = vunpack.c.h.b16 %v214
        %v250 = vunpack.c.l.b16 %v215
        %v251 = vunpack.c.h.b16 %v215
        %v252 = vpack.c.b16 %v250, %v248
        %v253 = vpack.c.b16 %v251, %v249
        %vm256 = vcmask 130048
        %v258 = vsel %vm256, %v220, 0
        %v261 = vsel %vm256, %v221, 0
        %263 = vmatpush.bf16.msra.mxu0 0
        %264 = vmatpush.bf16.msra.mxu0 0
        %265 = vmatpush.bf16.msra.mxu0 0
        %266 = vmatpush.bf16.msra.mxu0 0
        %267 = vmatpush.bf16.msra.mxu0 0
        %268 = vmatpush.bf16.msra.mxu0 0
        %269 = vmatpush.bf16.msra.mxu0 0
        %270 = vmatpush.bf16.msra.mxu0 %v252
        %271 = vmatmul.bf16.gmra.mxu0 %v258
        %v272 = vpop.f32.mrf.mxu0
        %v273 = vadd.f32 %v229, %v272
        %v274 = vpop.f32.mrf.mxu0
        %v275 = vadd.f32 %v234, %v274
        %276 = vmatmul.bf16.gmra.mxu0 %v261
        %v277 = vpop.f32.mrf.mxu0
        %v278 = vadd.f32 %v239, %v277
        %v279 = vpop.f32.mrf.mxu0
        %v280 = vadd.f32 %v244, %v279
        %281 = vdwg.mxu0
        %282 = vmatpush.bf16.msra.mxu0 0
        %283 = vmatpush.bf16.msra.mxu0 0
        %284 = vmatpush.bf16.msra.mxu0 0
        %285 = vmatpush.bf16.msra.mxu0 0
        %286 = vmatpush.bf16.msra.mxu0 0
        %287 = vmatpush.bf16.msra.mxu0 0
        %288 = vmatpush.bf16.msra.mxu0 0
        %289 = vmatpush.bf16.msra.mxu0 %v253
        %290 = vmatmul.bf16.gmra.mxu0 %v258
        %v291 = vpop.f32.mrf.mxu0
        %v292 = vadd.f32 %v229, %v291
        %v293 = vpop.f32.mrf.mxu0
        %v294 = vadd.f32 %v234, %v293
        %295 = vmatmul.bf16.gmra.mxu0 %v261
        %v296 = vpop.f32.mrf.mxu0
        %v297 = vadd.f32 %v239, %v296
        %v298 = vpop.f32.mrf.mxu0
        %v299 = vadd.f32 %v244, %v298
        %300 = vdwg.mxu0
        %v301 = vmul.f32 %v273, 0.01
        %v302 = vmul.f32 %v292, 0.01
        %v303 = vmul.f32 %v275, 0.01
        %v304 = vmul.f32 %v294, 0.01
        %v305 = vmul.f32 %v278, 0.01
        %v306 = vmul.f32 %v297, 0.01
        %v307 = vmul.f32 %v280, 0.01
        %v308 = vmul.f32 %v299, 0.01
        %v309 = vmax.f32 %v273, %v301
        %v310 = vmax.f32 %v292, %v302
        %v311 = vmax.f32 %v275, %v303
        %v312 = vmax.f32 %v294, %v304
        %v313 = vmax.f32 %v278, %v305
        %v314 = vmax.f32 %v297, %v306
        %v315 = vmax.f32 %v280, %v307
        %v316 = vmax.f32 %v299, %v308
        %v317 = vld [vmem:[%s1 + $0x20] sm:$0xff]
        %v318 = vld [vmem:[%s1 + $0x28] sm:$0xff]
        %v319 = vpack.c.bf16 %v318, %v317
        %v320 = vpack.c.bf16 %v311, %v309
        %v321 = vpack.c.bf16 %v312, %v310
        %v322 = vpack.c.bf16 %v315, %v313
        %v323 = vpack.c.bf16 %v316, %v314
        %v324 = vld [vmem:[%s1 + $0x30] sm:$0xff]
        %v325 = vld [vmem:[%s1 + $0x38] sm:$0xff]
        %v326 = vpack.c.bf16 %v325, %v324
        %vm327 = vcmask 261120
        %v329 = vsel %vm327, %v326, 0
        %331 = vmatpush.bf16.msra.mxu0 0
        %332 = vmatpush.bf16.msra.mxu0 0
        %333 = vmatpush.bf16.msra.mxu0 0
        %334 = vmatpush.bf16.msra.mxu0 0
        %335 = vmatpush.bf16.msra.mxu0 0
        %336 = vmatpush.bf16.msra.mxu0 0
        %337 = vmatpush.bf16.msra.mxu0 %v322
        %338 = vmatpush.bf16.msra.mxu0 %v320
        %339 = vmatmul.bf16.gmra.mxu0 %v329
        %v340 = vpop.f32.mrf.mxu0
        %v341 = vadd.f32 0.0, %v340
        %v342 = vpop.f32.mrf.mxu0
        %v343 = vadd.f32 0.0, %v342
        %344 = vdwg.mxu0
        %345 = vmatpush.bf16.msra.mxu0 0
        %346 = vmatpush.bf16.msra.mxu0 0
        %347 = vmatpush.bf16.msra.mxu0 0
        %348 = vmatpush.bf16.msra.mxu0 0
        %349 = vmatpush.bf16.msra.mxu0 0
        %350 = vmatpush.bf16.msra.mxu0 0
        %351 = vmatpush.bf16.msra.mxu0 %v323
        %352 = vmatpush.bf16.msra.mxu0 %v321
        %353 = vmatmul.bf16.gmra.mxu0 %v329
        %v354 = vpop.f32.mrf.mxu0
        %v355 = vadd.f32 0.0, %v354
        %v356 = vpop.f32.mrf.mxu0
        %v357 = vadd.f32 0.0, %v356
        %358 = vdwg.mxu0
        %v360 = vsel %vm256, %v319, 0
        %362 = vmatpush.bf16.msra.mxu0 0
        %363 = vmatpush.bf16.msra.mxu0 0
        %364 = vmatpush.bf16.msra.mxu0 0
        %365 = vmatpush.bf16.msra.mxu0 0
        %366 = vmatpush.bf16.msra.mxu0 0
        %367 = vmatpush.bf16.msra.mxu0 0
        %368 = vmatpush.bf16.msra.mxu0 0
        %369 = vmatpush.bf16.msra.mxu0 %v252
        %370 = vmatmul.bf16.gmra.mxu0 %v360
        %v371 = vpop.f32.mrf.mxu0
        %v372 = vadd.f32 %v341, %v371
        %v373 = vpop.f32.mrf.mxu0
        %v374 = vadd.f32 %v343, %v373
        %375 = vdwg.mxu0
        %376 = vmatpush.bf16.msra.mxu0 0
        %377 = vmatpush.bf16.msra.mxu0 0
        %378 = vmatpush.bf16.msra.mxu0 0
        %379 = vmatpush.bf16.msra.mxu0 0
        %380 = vmatpush.bf16.msra.mxu0 0
        %381 = vmatpush.bf16.msra.mxu0 0
        %382 = vmatpush.bf16.msra.mxu0 0
        %383 = vmatpush.bf16.msra.mxu0 %v253
        %384 = vmatmul.bf16.gmra.mxu0 %v360
        %v385 = vpop.f32.mrf.mxu0
        %v386 = vadd.f32 %v355, %v385
        %v387 = vpop.f32.mrf.mxu0
        %v388 = vadd.f32 %v357, %v387
        %389 = vdwg.mxu0
        %v390 = vld [vmem:[%s2 + $0x20] sm:$0xff]
        %v391 = vld [vmem:[%s2 + $0x28] sm:$0xff]
        %393 = vset.pattern.permute.xlu0 0
        %394 = vperm.xlu0 %393, %v390
        %v395 = vpop.permute.xlu0 %394
        %398 = vset.pattern.permute.xlu0 0
        %399 = vperm.xlu0 %398, %v391
        %v400 = vpop.permute.xlu0 %399
        %v402 = vadd.f32 %v372, %v395
        %v403 = vadd.f32 %v386, %v395
        %v404 = vadd.f32 %v374, %v400
        %v405 = vadd.f32 %v388, %v400
        %v406 = vmul.f32 %v402, 0.01
        %v407 = vmul.f32 %v403, 0.01
        %v408 = vmul.f32 %v404, 0.01
        %v409 = vmul.f32 %v405, 0.01
        %v410 = vmax.f32 %v402, %v406
        %v411 = vmax.f32 %v403, %v407
        %v412 = vmax.f32 %v404, %v408
        %v413 = vmax.f32 %v405, %v409
        %v414 = vld [vmem:[%s1 + $0x40] sm:$0xff]
        %v415 = vpack.c.bf16 %v414, %v414
        %v416 = vpack.c.bf16 %v412, %v410
        %v417 = vpack.c.bf16 %v413, %v411
        %v418 = vld [vmem:[%s1 + $0x48] sm:$0xff]
        %v419 = vpack.c.bf16 %v418, %v418
        %v421 = vsel %vm256, %v419, 0
        %423 = vmatpush.bf16.msra.mxu0 0
        %424 = vmatpush.bf16.msra.mxu0 0
        %425 = vmatpush.bf16.msra.mxu0 0
        %426 = vmatpush.bf16.msra.mxu0 0
        %427 = vmatpush.bf16.msra.mxu0 0
        %428 = vmatpush.bf16.msra.mxu0 0
        %429 = vmatpush.bf16.msra.mxu0 0
        %430 = vmatpush.bf16.msra.mxu0 %v416
        %431 = vmatmul.bf16.gmra.mxu0 %v421
        %v432 = vpop.f32.mrf.mxu0
        %v433 = vadd.f32 0.0, %v432
        %v434 = vpop.f32.mrf.mxu0
        %435 = vdwg.mxu0
        %436 = vmatpush.bf16.msra.mxu0 0
        %437 = vmatpush.bf16.msra.mxu0 0
        %438 = vmatpush.bf16.msra.mxu0 0
        %439 = vmatpush.bf16.msra.mxu0 0
        %440 = vmatpush.bf16.msra.mxu0 0
        %441 = vmatpush.bf16.msra.mxu0 0
        %442 = vmatpush.bf16.msra.mxu0 0
        %443 = vmatpush.bf16.msra.mxu0 %v417
        %444 = vmatmul.bf16.gmra.mxu0 %v421
        %v445 = vpop.f32.mrf.mxu0
        %v446 = vadd.f32 0.0, %v445
        %v447 = vpop.f32.mrf.mxu0
        %448 = vdwg.mxu0
        %v450 = vsel %vm256, %v415, 0
        %452 = vmatpush.bf16.msra.mxu0 0
        %453 = vmatpush.bf16.msra.mxu0 0
        %454 = vmatpush.bf16.msra.mxu0 0
        %455 = vmatpush.bf16.msra.mxu0 0
        %456 = vmatpush.bf16.msra.mxu0 0
        %457 = vmatpush.bf16.msra.mxu0 0
        %458 = vmatpush.bf16.msra.mxu0 0
        %459 = vmatpush.bf16.msra.mxu0 %v252
        %460 = vmatmul.bf16.gmra.mxu0 %v450
        %v461 = vpop.f32.mrf.mxu0
        %v462 = vadd.f32 %v433, %v461
        %v463 = vpop.f32.mrf.mxu0
        %464 = vdwg.mxu0
        %465 = vmatpush.bf16.msra.mxu0 0
        %466 = vmatpush.bf16.msra.mxu0 0
        %467 = vmatpush.bf16.msra.mxu0 0
        %468 = vmatpush.bf16.msra.mxu0 0
        %469 = vmatpush.bf16.msra.mxu0 0
        %470 = vmatpush.bf16.msra.mxu0 0
        %471 = vmatpush.bf16.msra.mxu0 0
        %472 = vmatpush.bf16.msra.mxu0 %v253
        %473 = vmatmul.bf16.gmra.mxu0 %v450
        %v474 = vpop.f32.mrf.mxu0
        %v475 = vadd.f32 %v446, %v474
        %v476 = vpop.f32.mrf.mxu0
        %477 = vdwg.mxu0
        %v478 = vld [vmem:[%s2 + $0x30] sm:$0xff]
        %480 = vset.pattern.permute.xlu0 0
        %481 = vperm.xlu0 %480, %v478
        %v482 = vpop.permute.xlu0 %481
        %v484 = vadd.f32 %v462, %v482
        %v485 = vadd.f32 %v475, %v482
        %v486 = vmul.f32 %v484, 0.01
        %v487 = vmul.f32 %v485, 0.01
        %v488 = vmax.f32 %v484, %v486
        %v489 = vmax.f32 %v485, %v487
        %v490 = vld [vmem:[%s1 + $0x50] sm:$0xff]
        %v491 = vpack.c.bf16 %v490, %v490
        %v492 = vpack.c.bf16 %v488, %v488
        %v493 = vpack.c.bf16 %v489, %v489
        %v494 = vld [vmem:[%s1 + $0x58] sm:$0xff]
        %v495 = vpack.c.bf16 %v494, %v494
        %vm496 = vcmask 64512
        %v498 = vsel %vm496, %v495, 0
        %vm500 = vcmask 1043456
        %v502 = vsel %vm500, %v492, 0
        %v505 = vsel %vm500, %v493, 0
        %507 = vmatpush.bf16.msra.mxu0 0
        %508 = vmatpush.bf16.msra.mxu0 0
        %509 = vmatpush.bf16.msra.mxu0 0
        %510 = vmatpush.bf16.msra.mxu0 0
        %511 = vmatpush.bf16.msra.mxu0 0
        %512 = vmatpush.bf16.msra.mxu0 0
        %513 = vmatpush.bf16.msra.mxu0 0
        %514 = vmatpush.bf16.msra.mxu0 %v502
        %515 = vmatmul.bf16.gmra.mxu0 %v498
        %v516 = vpop.f32.mrf.mxu0
        %v517 = vadd.f32 0.0, %v516
        %v518 = vpop.f32.mrf.mxu0
        %519 = vdwg.mxu0
        %520 = vmatpush.bf16.msra.mxu0 0
        %521 = vmatpush.bf16.msra.mxu0 0
        %522 = vmatpush.bf16.msra.mxu0 0
        %523 = vmatpush.bf16.msra.mxu0 0
        %524 = vmatpush.bf16.msra.mxu0 0
        %525 = vmatpush.bf16.msra.mxu0 0
        %526 = vmatpush.bf16.msra.mxu0 0
        %527 = vmatpush.bf16.msra.mxu0 %v505
        %528 = vmatmul.bf16.gmra.mxu0 %v498
        %v529 = vpop.f32.mrf.mxu0
        %v530 = vadd.f32 0.0, %v529
        %v531 = vpop.f32.mrf.mxu0
        %532 = vdwg.mxu0
        %v534 = vsel %vm256, %v491, 0
        %536 = vmatpush.bf16.msra.mxu0 0
        %537 = vmatpush.bf16.msra.mxu0 0
        %538 = vmatpush.bf16.msra.mxu0 0
        %539 = vmatpush.bf16.msra.mxu0 0
        %540 = vmatpush.bf16.msra.mxu0 0
        %541 = vmatpush.bf16.msra.mxu0 0
        %542 = vmatpush.bf16.msra.mxu0 0
        %543 = vmatpush.bf16.msra.mxu0 %v252
        %544 = vmatmul.bf16.gmra.mxu0 %v534
        %v545 = vpop.f32.mrf.mxu0
        %v546 = vadd.f32 %v517, %v545
        %v547 = vpop.f32.mrf.mxu0
        %548 = vdwg.mxu0
        %549 = vmatpush.bf16.msra.mxu0 0
        %550 = vmatpush.bf16.msra.mxu0 0
        %551 = vmatpush.bf16.msra.mxu0 0
        %552 = vmatpush.bf16.msra.mxu0 0
        %553 = vmatpush.bf16.msra.mxu0 0
        %554 = vmatpush.bf16.msra.mxu0 0
        %555 = vmatpush.bf16.msra.mxu0 0
        %556 = vmatpush.bf16.msra.mxu0 %v253
        %557 = vmatmul.bf16.gmra.mxu0 %v534
        %v558 = vpop.f32.mrf.mxu0
        %v559 = vadd.f32 %v530, %v558
        %v560 = vpop.f32.mrf.mxu0
        %561 = vdwg.mxu0
        %v562 = vld [vmem:[%s2 + $0x38] sm:$0xff]
        %564 = vset.pattern.permute.xlu0 0
        %565 = vperm.xlu0 %564, %v562
        %v566 = vpop.permute.xlu0 %565
        %v568 = vadd.f32 %v546, %v566
        %v569 = vadd.f32 %v559, %v566
        %v570 = vmul.f32 %v568, 0.01
        %v571 = vmul.f32 %v569, 0.01
        %v572 = vmax.f32 %v568, %v570
        %v573 = vmax.f32 %v569, %v571
        %v574 = vpack.c.bf16 %v572, %v572
        %v575 = vpack.c.bf16 %v573, %v573
        %v576 = vld [vmem:[%s1 + $0x60] sm:$0xff]
        %v577 = vpack.c.bf16 %v576, %v576
        %v578 = vld [vmem:[%s2 + $0x40] sm:$0xff]
        %580 = vset.pattern.permute.xlu0 0
        %581 = vperm.xlu0 %580, %v578
        %v582 = vpop.permute.xlu0 %581
        %v585 = vsel %vm496, %v577, 0
        %v588 = vsel %vm500, %v574, 0
        %v591 = vsel %vm500, %v575, 0
        %593 = vmatpush.bf16.msra.mxu0 0
        %594 = vmatpush.bf16.msra.mxu0 0
        %595 = vmatpush.bf16.msra.mxu0 0
        %596 = vmatpush.bf16.msra.mxu0 0
        %597 = vmatpush.bf16.msra.mxu0 0
        %598 = vmatpush.bf16.msra.mxu0 0
        %599 = vmatpush.bf16.msra.mxu0 0
        %600 = vmatpush.bf16.msra.mxu0 %v588
        %601 = vmatmul.bf16.gmra.mxu0 %v585
        %v602 = vpop.f32.mrf.mxu0
        %v603 = vadd.f32 %v582, %v602
        %v604 = vpop.f32.mrf.mxu0
        %605 = vdwg.mxu0
        %606 = vmatpush.bf16.msra.mxu0 0
        %607 = vmatpush.bf16.msra.mxu0 0
        %608 = vmatpush.bf16.msra.mxu0 0
        %609 = vmatpush.bf16.msra.mxu0 0
        %610 = vmatpush.bf16.msra.mxu0 0
        %611 = vmatpush.bf16.msra.mxu0 0
        %612 = vmatpush.bf16.msra.mxu0 0
        %613 = vmatpush.bf16.msra.mxu0 %v591
        %614 = vmatmul.bf16.gmra.mxu0 %v585
        %v615 = vpop.f32.mrf.mxu0
        %v616 = vadd.f32 %v582, %v615
        %v617 = vpop.f32.mrf.mxu0
        %618 = vdwg.mxu0
        %v619 = vtanh.pop %v603
        %v620 = vtanh.pop %v616
        %v621 = vmul.f32 %v619, 0.1
        %v622 = vmul.f32 %v620, 0.1
        %v625 = vrot.slane %v622, 7
        %vm626 = vcmask 1040384
        %v627 = vsel %vm626, %v621, %v625
        %v629 = vlaneseq
        %vm630 = vcmp.ge.s32.totalorder %v629, 0
        %vm631 = vcmp.lt.s32.totalorder %v629, 256
        %vm632 = vmand %vm630, %vm631
        %633 = vst.msk [vmem:[%s211] ss:$2 sm:$0x3] %vm632, %v627
        %v634 = vxor.u32 %v603, 2147483648
        %v635 = vxor.u32 %v616, 2147483648
        %v636 = vmul.f32 %v634, 1.442695
        %v637 = vpow.pop %v636
        %v638 = vmul.f32 %v635, 1.442695
        %v639 = vpow.pop %v638
        %v640 = vadd.f32 %v637, 1.0
        %v641 = vadd.f32 %v639, 1.0
        %v642 = vrcp.pop %v640
        %v643 = vmul.f32 %v640, %v642
        %v644 = vsub.f32 1.0, %v643
        %v645 = vmul.f32 %v642, %v644
        %v646 = vadd.f32 %v642, %v645
        %vm647 = vweird.f32 %v640
        %vm648 = vweird.f32 %v642
        %vm649 = vmor %vm647, %vm648
        %v650 = vsel %vm649, %v642, %v646
        %v651 = vand.u32 2147483647, %v640
        %vm652 = vcmp.eq.f32.partialorder %v651, 8.507059e+37
        %v653 = vand.u32 %v640, 2147483648
        %v654 = vor.u32 1.1754944e-38, %v653
        %v655 = vsel %vm652, %v654, %v650
        %v656 = vmul.f32 1.0, %v655
        %v657 = vrcp.pop %v641
        %v658 = vmul.f32 %v641, %v657
        %v659 = vsub.f32 1.0, %v658
        %v660 = vmul.f32 %v657, %v659
        %v661 = vadd.f32 %v657, %v660
        %vm662 = vweird.f32 %v641
        %vm663 = vweird.f32 %v657
        %vm664 = vmor %vm662, %vm663
        %v665 = vsel %vm664, %v657, %v661
        %v666 = vand.u32 2147483647, %v641
        %vm667 = vcmp.eq.f32.partialorder %v666, 8.507059e+37
        %v668 = vand.u32 %v641, 2147483648
        %v669 = vor.u32 1.1754944e-38, %v668
        %v670 = vsel %vm667, %v669, %v665
        %v671 = vmul.f32 1.0, %v670
        %674 = vst [vmem:[#allocation1] sm:$0xff] %v656
        %675 = vst [vmem:[#allocation1 + $0x9] sm:$0xff] %v671
        %s676 = scalar_lea.vmem [#allocation1], 1
        %v677 = vld [vmem:[%s676] ss:$9 sm:$0xff]
        %s679 = scalar_lea.vmem %s211, 1
        %680 = vst.msk [vmem:[%s679] ss:$2 sm:$0x3] %vm632, %v677
        %s681 = smul.u32 2, %s14
        %p682 = scmp.lt.s32.totalorder %s681, 3
        %s683 = scalar_select %p682, %s681, 3
        %s684 = smul.addr %s683, 2
        %s685 = scalar_lea.vmem %s3, %s684
        // Predicated region
        $region71: #{translator_forward.1} parent=65 // pred_check
          %p686 = pneg %p100
        $region72: #{translator_forward.1} parent=65 // pred_check_branch
          %688 = sbr.rel (%p686) target = $region74
        $region73: #{translator_forward.1} parent=65 // pred_region
          %s689 = smul.u32 2, %s14
        $region74: #{translator_forward.1} parent=65 // pred_fallthru
          _
      $region66: #{translator_forward.1} parent=5 // pred_fallthru
        _
      %p690 = scmp.le.s32.totalorder 2, %s9
      // Predicated region
      $region75: #{translator_forward.1} parent=5 // pred_check
        %p691 = pneg %p690
      $region76: #{translator_forward.1} parent=5 // pred_check_branch
        %693 = sbr.rel (%p691) target = $region78
      $region77: #{translator_forward.1} parent=5 // pred_region
        %s694 = ssub.s32 %s9, 2
        // Predicated region
        $region79: #{translator_forward.1} parent=77 // pred_check
          %p695 = pneg %p106
        $region80: #{translator_forward.1} parent=77 // pred_check_branch
          %697 = sbr.rel (%p695) target = $region82
        $region81: #{translator_forward.1} parent=77 // pred_region
          %s698 = smul.u32 2, %s15
          %p699 = scmp.lt.s32.totalorder %s698, 3
          %s700 = scalar_select %p699, %s698, 3
          %s701 = smul.addr %s700, 2
          %s702 = scalar_lea.vmem %s3, %s701
        $region82: #{translator_forward.1} parent=77 // pred_fallthru
          _
      $region78: #{translator_forward.1} parent=5 // pred_fallthru
        _
    $region6: #{translator_forward.1} parent=1 // loop_footer
      %s13 = sadd.s32 1, %s9
    $region7: #{translator_forward.1} parent=1 // loop_footer_branch
      %8 = sbr.rel target = $region3
    $region8: #{translator_forward.1} parent=1 // loop_exit
      _

</llo_original>
